<compile_context>
chip_gen: v7x
topology: tpu7x:2x2x1
jax: 0.10.0
libtpu: 0.0.40
codegen_flags: <defaults>
</compile_context>

<pallas_src>
import functools
import math

import jax
import jax.numpy as jnp
from jax.experimental import pallas as pl
from jax.experimental.pallas import tpu as pltpu


def _round_up(a, m):
    return ((a + m - 1) // m) * m


def _tdnn_kernel(x_ref, xh_ref, w_ref, b_ref, o_ref, x2_ref, *, taps, cdt):
    # x_ref : (1, D_in_pad, T_TILE)    current time-tile of (zero-padded) x
    # xh_ref: (1, D_in_pad, HALO_BLK)  leading columns of the NEXT time-tile (halo)
    # w_ref : (N_TILE, K*D_in_pad)     im2col-reshaped weights (compute dtype)
    # b_ref : (N_TILE, 1)              f32 bias
    # o_ref : (1, N_TILE, T_TILE)      output tile; lane (last) dim = time
    # x2_ref: (K*D_in_pad, T_TILE)     persistent im2col scratch, built once per
    #                                  (batch, time-tile) group, reused across all
    #                                  output-channel tiles (innermost grid axis).
    t_tile = o_ref.shape[2]

    @pl.when(pl.program_id(2) == 0)
    def _build_im2col():
        # In-register cast (e.g. f32 -> bf16): x stays f32 in HBM, so there is no
        # separate full-array cast pass doubling x HBM traffic.
        win = jnp.concatenate([x_ref[0], xh_ref[0]], axis=1).astype(cdt)
        x2_ref[...] = jnp.concatenate(
            [win[:, off:off + t_tile] for off in taps], axis=0)

    # Single MXU matmul with all K taps folded into the contraction (f32 accumulate).
    acc = jnp.dot(w_ref[...], x2_ref[...], preferred_element_type=jnp.float32)
    acc = acc + b_ref[...]                               # (N_TILE, 1) broadcast, f32
    o_ref[0] = jnp.maximum(acc, 0.0).astype(o_ref.dtype)


def tdnn_forward(x, kernel, bias, context, full_context=True, compute_dtype=None,
                 t_tile=None, n_tile=None):
    """x: [B, D_in, T] (PyTorch conv1d layout). Returns [B, D_out, T_out]."""
    assert context[0] <= context[-1], "context must be ascending"
    ctx = list(range(context[0], context[-1] + 1)) if full_context else list(context)
    assert all(a < b for a, b in zip(ctx, ctx[1:])), "context must be sorted ascending"
    K = len(ctx)
    D_out, D_in, Kw = kernel.shape
    assert Kw == K, "kernel width must match (expanded) context length"
    B, D_in_x, T = x.shape
    assert D_in_x == D_in

    # valid_steps windowing, exactly as in the PyTorch module.
    start = 0 if ctx[0] >= 0 else -ctx[0]
    end = T if ctx[-1] <= 0 else T - ctx[-1]
    T_out = end - start
    assert T_out > 0, "sequence too short for this context"
    taps = tuple(c + start for c in ctx)               # all >= 0
    halo = max(taps)                                    # columns needed past a tile

    out_dtype = x.dtype
    cdt = jnp.dtype(compute_dtype) if compute_dtype is not None else jnp.dtype(x.dtype)
    xbytes = jnp.dtype(x.dtype).itemsize
    cbytes = cdt.itemsize
    obytes = jnp.dtype(out_dtype).itemsize

    LANE = 128
    sub = 8 if cbytes >= 4 else 16                      # sublane tile of compute dtype
    D_in_pad = _round_up(D_in, sub)
    KD = K * D_in_pad

    # Halo block: smallest power-of-two multiple of 128 covering the largest tap, so
    # it always divides the (power-of-two multiple of 128) time tile.
    halo_blk = LANE
    while halo_blk < halo:
        halo_blk *= 2

    # ---- tile selection under a VMEM budget -------------------------------------
    def vmem_bytes(tt, nt):
        return (2 * D_in_pad * tt * xbytes              # x main block (double buffered)
                + 2 * D_in_pad * halo_blk * xbytes      # x halo block
                + 2 * nt * KD * cbytes                  # weight tile
                + 2 * nt * 4                            # bias tile
                + 2 * nt * tt * obytes                  # output tile
                + KD * tt * cbytes                      # persistent im2col scratch
                + 2 * nt * tt * 4)                      # f32 matmul result + relu temp

    VMEM_BUDGET = 40 * 1024 * 1024                      # safe on v5e/v6e/v7x
    if n_tile is None:
        n_tile_auto = True
        n_tile = D_out if D_out <= 256 else 256         # 256-row tiles feed v6e/v7x MXU
    else:
        n_tile_auto = False
    if t_tile is None:
        # Big, lane-dense time tiles so the ~0.35us/step grid overhead is amortized.
        target = 1024 if T_out >= 1024 else 512
        t_tile = max(halo_blk, LANE)
        while t_tile < target and t_tile < T_out:
            t_tile *= 2
        while (vmem_bytes(t_tile, n_tile) > VMEM_BUDGET
               and t_tile // 2 >= max(halo_blk, LANE)):
            t_tile //= 2
    if n_tile_auto:
        while vmem_bytes(t_tile, n_tile) > VMEM_BUDGET and n_tile > 128:
            n_tile = max(128, n_tile // 2)
    assert t_tile % LANE == 0 and t_tile % halo_blk == 0
    # TODO(synk): if K*D_in_pad is so large that the (128,128) tiles still exceed the
    # budget, split the contraction over an extra (accumulating) grid axis.
    # TODO(synk): for workloads with many very short utterances (T_out << 128), fold
    # several batch items into the lane axis so output stores stay 128-lane dense.

    grid_t = (T_out + t_tile - 1) // t_tile
    grid_n = (D_out + n_tile - 1) // n_tile

    # Zero-pad channels to the sublane tile and time so every (main, halo) block is in
    # bounds; out-of-range output rows/columns are masked by Pallas on store.
    T_need = grid_t * t_tile + halo_blk
    pad_d = D_in_pad - D_in
    pad_t = max(0, T_need - T)
    if pad_d or pad_t:
        x = jnp.pad(x, ((0, 0), (0, pad_d), (0, pad_t)))

    # im2col weight layout: w2[o, k*D_in_pad + d] = kernel[o, d, k]   (tiny tensor).
    w2 = jnp.pad(kernel, ((0, 0), (0, pad_d), (0, 0)))
    w2 = jnp.transpose(w2, (0, 2, 1)).reshape(D_out, KD).astype(cdt)
    b2 = bias.astype(jnp.float32).reshape(D_out, 1)

    tt_over_hb = t_tile // halo_blk
    vmem_limit = int(min(64 * 1024 * 1024,
                         max(2 * vmem_bytes(t_tile, n_tile), 32 * 1024 * 1024)))
    cost = pl.CostEstimate(
        flops=int(2 * B * D_out * T_out * K * D_in),
        transcendentals=0,
        bytes_accessed=int(B * D_in * T * xbytes + D_out * K * D_in * cbytes
                           + D_out * 4 + B * D_out * T_out * obytes))

    kern = functools.partial(_tdnn_kernel, taps=taps, cdt=cdt)
    out = pl.pallas_call(
        kern,
        out_shape=jax.ShapeDtypeStruct((B, D_out, T_out), out_dtype),
        grid_spec=pltpu.PrefetchScalarGridSpec(
            num_scalar_prefetch=0,
            grid=(B, grid_t, grid_n),                   # channel tiles innermost
            in_specs=[
                # main time tile of x (re-DMA'd only when (b, t) changes)
                pl.BlockSpec((1, D_in_pad, t_tile), lambda b, t, n: (b, 0, t)),
                # leading columns of the next tile (halo for the context taps)
                pl.BlockSpec((1, D_in_pad, halo_blk),
                             lambda b, t, n: (b, 0, (t + 1) * tt_over_hb)),
                pl.BlockSpec((n_tile, KD), lambda b, t, n: (n, 0)),
                pl.BlockSpec((n_tile, 1), lambda b, t, n: (n, 0)),
            ],
            out_specs=pl.BlockSpec((1, n_tile, t_tile), lambda b, t, n: (b, n, t)),
            scratch_shapes=[pltpu.VMEM((KD, t_tile), cdt)],
        ),
        compiler_params=pltpu.CompilerParams(
            dimension_semantics=("parallel", "parallel", "arbitrary"),
            vmem_limit_bytes=vmem_limit),
        cost_estimate=cost,
    )(x, x, w2, b2)
    return out


def tdnn_reference(x, kernel, bias, context, full_context=True):
    """Pure-JAX reference mirroring the PyTorch loop, for verification."""
    ctx = list(range(context[0], context[-1] + 1)) if full_context else list(context)
    B, D_in, T = x.shape
    start = 0 if ctx[0] >= 0 else -ctx[0]
    end = T if ctx[-1] <= 0 else T - ctx[-1]
    steps = jnp.arange(start, end)
    idx = jnp.array(ctx)[:, None] + steps[None, :]          # (K, T_out)
    feats = x[:, :, idx]                                     # (B, D_in, K, T_out)
    out = jnp.einsum("bdkc,odk->boc", feats, kernel) + bias[None, :, None]
    return jnp.maximum(out, 0.0)


if __name__ == "__main__":
    context = [-2, 2]
    input_dim, output_dim = 16, 32
    batch, seq_len = 2, 16
    K = context[-1] - context[0] + 1  # 5

    stdv = 1.0 / math.sqrt(input_dim)
    key = jax.random.PRNGKey(0)
    kx, kw, kb, k2x, k2w, k2b = jax.random.split(key, 6)
    x = jax.random.normal(kx, (batch, input_dim, seq_len), dtype=jnp.float32)
    kernel = stdv * jax.random.normal(kw, (output_dim, input_dim, K), dtype=jnp.float32)
    bias = stdv * jax.random.normal(kb, (output_dim,), dtype=jnp.float32)

    # f32 path (matches PyTorch numerics tightly)
    out = jax.block_until_ready(tdnn_forward(x, kernel, bias, context, True))
    ref = tdnn_reference(x, kernel, bias, context, True)
    assert out.shape == (batch, output_dim, seq_len - K + 1), out.shape
    assert bool(jnp.allclose(out, ref, atol=1e-4, rtol=1e-4)), "f32 mismatch vs reference"

    # bf16 compute (v6e/v7x MXU-friendly), f32 accumulation; x cast happens in-kernel.
    out_bf16 = jax.block_until_ready(
        tdnn_forward(x, kernel, bias, context, True, compute_dtype=jnp.bfloat16))
    assert bool(jnp.allclose(out_bf16, ref, atol=8e-2, rtol=8e-2)), "bf16 mismatch"

    # non-contiguous context (full_context=False) -- exercises the tap offsets
    sparse_ctx = [-2, 0, 2]
    kernel3 = stdv * jax.random.normal(
        kw, (output_dim, input_dim, len(sparse_ctx)), dtype=jnp.float32)
    out_s = jax.block_until_ready(
        tdnn_forward(x, kernel3, bias, sparse_ctx, full_context=False))
    ref_s = tdnn_reference(x, kernel3, bias, sparse_ctx, full_context=False)
    assert bool(jnp.allclose(out_s, ref_s, atol=1e-4, rtol=1e-4)), "sparse-context mismatch"

    # Multi-tile / partial-tile / padded-D_in stress: grid_t > 1 (halo crossing tiles),
    # D_in not a sublane multiple, and (forced) partial D_out / time tiles.
    d_in2, d_out2, T2 = 12, 40, 700
    x2 = jax.random.normal(k2x, (2, d_in2, T2), dtype=jnp.float32)
    w2_ = (1.0 / math.sqrt(d_in2)) * jax.random.normal(
        k2w, (d_out2, d_in2, K), dtype=jnp.float32)
    b2_ = (1.0 / math.sqrt(d_in2)) * jax.random.normal(k2b, (d_out2,), dtype=jnp.float32)
    ref2 = tdnn_reference(x2, w2_, b2_, context, True)
    out2a = jax.block_until_ready(tdnn_forward(x2, w2_, b2_, context, True))
    out2b = jax.block_until_ready(
        tdnn_forward(x2, w2_, b2_, context, True, t_tile=128, n_tile=16))
    assert bool(jnp.allclose(out2a, ref2, atol=1e-4, rtol=1e-4)), "multi-tile mismatch"
    assert bool(jnp.allclose(out2b, ref2, atol=1e-4, rtol=1e-4)), "partial-tile mismatch"

    print("KERNEL_OK")
</pallas_src>

<mosaic_0001>
module attributes {stable_mosaic.version = 11 : i64} {
  func.func @_tdnn_kernel(%arg0: i32, %arg1: i32, %arg2: i32, %arg3: memref<1x16x128xf32, #tpu.memory_space<vmem>>, %arg4: memref<1x16x128xf32, #tpu.memory_space<vmem>>, %arg5: memref<32x80xf32, #tpu.memory_space<vmem>>, %arg6: memref<32x1xf32, #tpu.memory_space<vmem>>, %arg7: memref<1x32x128xf32, #tpu.memory_space<vmem>>, %arg8: memref<80x128xf32, #tpu.memory_space<vmem>>) attributes {dimension_semantics = [#tpu.dimension_semantics<parallel>, #tpu.dimension_semantics<parallel>, #tpu.dimension_semantics<arbitrary>], iteration_bounds = array<i64: 2, 1, 1>, scalar_prefetch = 0 : i64, scratch_operands = 1 : i64, tpu.core_type = #tpu.core_type<tc>, window_params = [{transform_indices = @transform_0, window_bounds = array<i64: 1, 16, 128>}, {transform_indices = @transform_1, window_bounds = array<i64: 1, 16, 128>}, {transform_indices = @transform_2, window_bounds = array<i64: 32, 80>}, {transform_indices = @transform_3, window_bounds = array<i64: 32, 1>}, {transform_indices = @transform_4, window_bounds = array<i64: 1, 32, 128>}]} {
    %c0_i32 = arith.constant 0 : i32
    %0 = arith.cmpi eq, %arg2, %c0_i32 : i32
    %1 = arith.extui %0 : i1 to i32
    %c0_i32_0 = arith.constant 0 : i32
    %2 = arith.cmpi ne, %1, %c0_i32_0 : i32
    scf.if %2 {
      %c0_10 = arith.constant 0 : index
      %c0_11 = arith.constant 0 : index
      %c0_12 = arith.constant 0 : index
      %14 = vector.load %arg3[%c0_10, %c0_11, %c0_12] : memref<1x16x128xf32, #tpu.memory_space<vmem>>, vector<1x16x128xf32>
      %15 = vector.shape_cast %14 : vector<1x16x128xf32> to vector<16x128xf32>
      %c0_13 = arith.constant 0 : index
      %c0_14 = arith.constant 0 : index
      %c0_15 = arith.constant 0 : index
      %16 = vector.load %arg4[%c0_13, %c0_14, %c0_15] : memref<1x16x128xf32, #tpu.memory_space<vmem>>, vector<1x16x128xf32>
      %17 = vector.shape_cast %16 : vector<1x16x128xf32> to vector<16x128xf32>
      %18 = tpu.concatenate %15, %17 in 1 : vector<16x128xf32>, vector<16x128xf32> -> vector<16x256xf32>
      %19 = vector.extract_strided_slice %18 {offsets = [0, 0], sizes = [16, 128], strides = [1, 1]} : vector<16x256xf32> to vector<16x128xf32>
      %20 = vector.extract_strided_slice %18 {offsets = [0, 1], sizes = [16, 128], strides = [1, 1]} : vector<16x256xf32> to vector<16x128xf32>
      %21 = vector.extract_strided_slice %18 {offsets = [0, 2], sizes = [16, 128], strides = [1, 1]} : vector<16x256xf32> to vector<16x128xf32>
      %22 = vector.extract_strided_slice %18 {offsets = [0, 3], sizes = [16, 128], strides = [1, 1]} : vector<16x256xf32> to vector<16x128xf32>
      %23 = vector.extract_strided_slice %18 {offsets = [0, 4], sizes = [16, 128], strides = [1, 1]} : vector<16x256xf32> to vector<16x128xf32>
      %24 = tpu.concatenate %19, %20, %21, %22, %23 in 0 : vector<16x128xf32>, vector<16x128xf32>, vector<16x128xf32>, vector<16x128xf32>, vector<16x128xf32> -> vector<80x128xf32>
      %c0_16 = arith.constant 0 : index
      %c0_17 = arith.constant 0 : index
      %25 = vector.load %arg8[%c0_16, %c0_17] : memref<80x128xf32, #tpu.memory_space<vmem>>, vector<80x128xf32>
      tpu.vector_store %arg8[%c0_16, %c0_17], %24 {strides = array<i32>} : memref<80x128xf32, #tpu.memory_space<vmem>>, vector<80x128xf32>,
    } else {
    }
    %c0 = arith.constant 0 : index
    %c0_1 = arith.constant 0 : index
    %3 = vector.load %arg5[%c0, %c0_1] : memref<32x80xf32, #tpu.memory_space<vmem>>, vector<32x80xf32>
    %c0_2 = arith.constant 0 : index
    %c0_3 = arith.constant 0 : index
    %4 = vector.load %arg8[%c0_2, %c0_3] : memref<80x128xf32, #tpu.memory_space<vmem>>, vector<80x128xf32>
    %cst = arith.constant dense<0.000000e+00> : vector<32x128xf32>
    %5 = tpu.matmul %3, %4, %cst {dimension_numbers = #tpu.dot_dimension_numbers<[1], [0], [0], [1], [0, 0, 1, 1], [], []>} : vector<32x80xf32>, vector<80x128xf32>, vector<32x128xf32> -> vector<32x128xf32>
    %c0_4 = arith.constant 0 : index
    %c0_5 = arith.constant 0 : index
    %6 = vector.load %arg6[%c0_4, %c0_5] : memref<32x1xf32, #tpu.memory_space<vmem>>, vector<32x1xf32>
    %7 = vector.broadcast %6 : vector<32x1xf32> to vector<32x128xf32>
    %8 = arith.addf %5, %7 : vector<32x128xf32>
    %cst_6 = arith.constant 0.000000e+00 : f32
    %9 = vector.broadcast %cst_6 : f32 to vector<32x128xf32>
    %10 = arith.maximumf %8, %9 : vector<32x128xf32>
    %c0_7 = arith.constant 0 : index
    %c0_8 = arith.constant 0 : index
    %c0_9 = arith.constant 0 : index
    %11 = vector.load %arg7[%c0_7, %c0_8, %c0_9] : memref<1x32x128xf32, #tpu.memory_space<vmem>>, vector<1x32x128xf32>
    %12 = vector.shape_cast %11 : vector<1x32x128xf32> to vector<32x128xf32>
    %13 = vector.shape_cast %10 : vector<32x128xf32> to vector<1x32x128xf32>
    tpu.vector_store %arg7[%c0_7, %c0_8, %c0_9], %13 {strides = array<i32>} : memref<1x32x128xf32, #tpu.memory_space<vmem>>, vector<1x32x128xf32>,
    return
  }
  func.func @transform_0(%arg0: i32, %arg1: i32, %arg2: i32) -> (i32, i32, i32) {
    %c0_i32 = arith.constant 0 : i32
    %c0_i32_0 = arith.constant 0 : i32
    return %arg0, %c0_i32, %arg1 : i32, i32, i32
  }
  func.func @transform_1(%arg0: i32, %arg1: i32, %arg2: i32) -> (i32, i32, i32) {
    %c1_i32 = arith.constant 1 : i32
    %0 = arith.addi %arg1, %c1_i32 : i32
    %c1_i32_0 = arith.constant 1 : i32
    %1 = arith.muli %0, %c1_i32_0 : i32
    %c0_i32 = arith.constant 0 : i32
    %c0_i32_1 = arith.constant 0 : i32
    return %arg0, %c0_i32, %1 : i32, i32, i32
  }
  func.func @transform_2(%arg0: i32, %arg1: i32, %arg2: i32) -> (i32, i32) {
    %c0_i32 = arith.constant 0 : i32
    %c0_i32_0 = arith.constant 0 : i32
    return %arg2, %c0_i32 : i32, i32
  }
  func.func @transform_3(%arg0: i32, %arg1: i32, %arg2: i32) -> (i32, i32) {
    %c0_i32 = arith.constant 0 : i32
    %c0_i32_0 = arith.constant 0 : i32
    return %arg2, %c0_i32 : i32, i32
  }
  func.func @transform_4(%arg0: i32, %arg1: i32, %arg2: i32) -> (i32, i32, i32) {
    %c0_i32 = arith.constant 0 : i32
    return %arg0, %arg2, %arg1 : i32, i32, i32
  }
}

</mosaic_0001>

<llo_original>
// kernel: tpu_custom_call.1
$region0: #{tpu_custom_call.1}
  #allocation0 [shape = 'u32[]', space=smem, size = 0x4, offset = 0x4, fixed_abs, tag = 'smem constant byte address 0x4 - core index']
  #allocation1 [shape = 'u32[144,128]{1,0:T(1,128)}', space=vmem, size = 0x12000, scoped, tag = 'internal scratch']
  #allocation2 [shape = 'f32[80,128]{1,0:T(8,128)}', space=vmem, size = 0xa000, scoped, tag = 'scratch operand']
  %s0 = inlined_call_operand.hbm [shape: f32[2,16,256], index: 0, kind: input, shape index: {}]
  %s1 = inlined_call_operand.hbm [shape: f32[2,16,256], index: 1, kind: input, shape index: {}]
  %s2 = inlined_call_operand.vmem [shape: f32[32,80], index: 2, kind: input, shape index: {}]
  %s3 = inlined_call_operand.vmem [shape: f32[32,1], index: 3, kind: input, shape index: {}]
  %s4 = inlined_call_operand.vmem [shape: f32[2,32,12], index: 4, kind: output, shape index: {}]
  %s5 = sld [smem:[#allocation0]]
  $region61: #{tpu_custom_call.1} parent=0
    _
  %s7 = ssub.s32 1, %s5
  %s8 = scalar_select 0, %s7, %s5
  $region1: #{tpu_custom_call.1} parent=0
    #allocation3 [shape = 'u8[16384]{0}', space=vmem, size = 0x4000, scoped, tag = 'input window, operand 0']
    #allocation4 [shape = 's32[2]{0}', space=sflag, size = 0x8, scoped, tag = 'scoped memory for tpu_custom_call.1']
    #allocation5 [shape = 'u8[16384]{0}', space=vmem, size = 0x4000, scoped, tag = 'input window, operand 1']
    #allocation6 [shape = 's32[2]{0}', space=sflag, size = 0x8, scoped, tag = 'scoped memory for tpu_custom_call.1']
    %9 = vsyncpa [#allocation4], 0
    %s10 = scalar_lea.sflag [#allocation4], 1
    %11 = vsyncpa %s10, 0
    %12 = vsyncpa [#allocation6], 0
    %s13 = scalar_lea.sflag [#allocation6], 1
    %14 = vsyncpa %s13, 0
    loop: start=0, step=1, limit=4
    $region2: #{tpu_custom_call.1} parent=1 // loop_pre_header
      _
    $region3: #{tpu_custom_call.1} parent=1 // loop_header
      %s16 = sphi 0, %s20
      %p17 = scmp.ge.s32.totalorder %s16, 4
      %s23 = sphi 0, %s42
      %s24 = sphi 0, %s38
      %s25 = sphi 0, %s34
      %s26 = sphi 0, %s23
      %s27 = sphi 0, %s24
      %s28 = sphi 0, %s25
      %s29 = sphi 0, %s26
      %s30 = sphi 0, %s27
      %s31 = sphi 0, %s28
      %s47 = sphi 0, %s49
      %s50 = sphi 0, %s47
      %s51 = sphi 0, %s50
      %s67 = sphi 0, %s51
      %s77 = sphi 0, %s79
      %s80 = sphi 0, %s77
      %s81 = sphi 0, %s80
      %s97 = sphi 0, %s81
      %s103 = sphi 0, %s105
      %s106 = sphi 0, %s103
      %s107 = sphi 0, %s106
      %s123 = sphi 0, %s107
      %s129 = sphi 0, %s131
      %s132 = sphi 0, %s129
      %s133 = sphi 0, %s132
      %s149 = sphi 0, %s133
      %s159 = sphi 0, %s161
      %s162 = sphi 0, %s159
      %s163 = sphi 0, %s162
      %s179 = sphi 0, %s163
    $region4: #{tpu_custom_call.1} parent=1 // loop_header_branch
      %19 = sbr.rel (%p17) target = $region8
    $region5: #{tpu_custom_call.1} parent=1 // loop_body
      %s21 = ssub.s32 %s16, 1
      %s22 = ssub.s32 %s16, 2
      %s32 = sadd.s32 1, %s25
      %p33 = scmp.ge.s32.totalorder %s32, 1
      %s34 = scalar_select %p33, 0, %s32
      %s35 = sadd.s32 1, %s24
      %s36 = scalar_select %p33, %s35, %s24
      %p37 = scmp.ge.s32.totalorder %s36, 1
      %s38 = scalar_select %p37, 0, %s36
      %s39 = sadd.s32 1, %s23
      %s40 = scalar_select %p37, %s39, %s23
      %p41 = scmp.ge.s32.totalorder %s40, 2
      %s42 = scalar_select %p41, 0, %s40
      %s43 = ssub.s32 %s23, %s42
      %s44 = ssub.s32 %s24, %s38
      %s45 = sor.u32 %s43, %s44
      %p46 = scmp.eq.s32.totalorder %s45, 0
      %s48 = sadd.s32 %s47, 1
      %s49 = scalar_select %p46, %s47, %s48
      %p52 = pneg %p46
      %p53 = scmp.eq.s32.totalorder %s16, 1
      %p54 = por %p52, %p53
      %p55 = scmp.ne.s32.totalorder %s47, %s50
      %p56 = scmp.eq.s32.totalorder %s16, 0
      %p57 = por %p55, %p56
      %p58 = scmp.ne.s32.totalorder %s47, %s50
      %p59 = scmp.eq.s32.totalorder %s21, 1
      %p60 = por %p58, %p59
      %p61 = scmp.ne.s32.totalorder %s50, %s51
      %p62 = scmp.eq.s32.totalorder %s21, 0
      %p63 = por %p61, %p62
      %p64 = scmp.ne.s32.totalorder %s50, %s51
      %p65 = scmp.eq.s32.totalorder %s22, 1
      %p66 = por %p64, %p65
      %p68 = scmp.ne.s32.totalorder %s51, %s67
      %p69 = scmp.eq.s32.totalorder %s22, 0
      %p70 = por %p68, %p69
      %s71 = sadd.s32 %s24, 1
      %s72 = sadd.s32 %s38, 1
      %s73 = ssub.s32 %s23, %s42
      %s74 = ssub.s32 %s71, %s72
      %s75 = sor.u32 %s73, %s74
      %p76 = scmp.eq.s32.totalorder %s75, 0
      %s78 = sadd.s32 %s77, 1
      %s79 = scalar_select %p76, %s77, %s78
      %p82 = pneg %p76
      %p83 = scmp.eq.s32.totalorder %s16, 1
      %p84 = por %p82, %p83
      %p85 = scmp.ne.s32.totalorder %s77, %s80
      %p86 = scmp.eq.s32.totalorder %s16, 0
      %p87 = por %p85, %p86
      %p88 = scmp.ne.s32.totalorder %s77, %s80
      %p89 = scmp.eq.s32.totalorder %s21, 1
      %p90 = por %p88, %p89
      %p91 = scmp.ne.s32.totalorder %s80, %s81
      %p92 = scmp.eq.s32.totalorder %s21, 0
      %p93 = por %p91, %p92
      %p94 = scmp.ne.s32.totalorder %s80, %s81
      %p95 = scmp.eq.s32.totalorder %s22, 1
      %p96 = por %p94, %p95
      %p98 = scmp.ne.s32.totalorder %s81, %s97
      %p99 = scmp.eq.s32.totalorder %s22, 0
      %p100 = por %p98, %p99
      %s101 = ssub.s32 %s25, %s34
      %p102 = scmp.eq.s32.totalorder %s101, 0
      %s104 = sadd.s32 %s103, 1
      %s105 = scalar_select %p102, %s103, %s104
      %p108 = pneg %p102
      %p109 = scmp.eq.s32.totalorder %s16, 1
      %p110 = por %p108, %p109
      %p111 = scmp.ne.s32.totalorder %s103, %s106
      %p112 = scmp.eq.s32.totalorder %s16, 0
      %p113 = por %p111, %p112
      %p114 = scmp.ne.s32.totalorder %s103, %s106
      %p115 = scmp.eq.s32.totalorder %s21, 1
      %p116 = por %p114, %p115
      %p117 = scmp.ne.s32.totalorder %s106, %s107
      %p118 = scmp.eq.s32.totalorder %s21, 0
      %p119 = por %p117, %p118
      %p120 = scmp.ne.s32.totalorder %s106, %s107
      %p121 = scmp.eq.s32.totalorder %s22, 1
      %p122 = por %p120, %p121
      %p124 = scmp.ne.s32.totalorder %s107, %s123
      %p125 = scmp.eq.s32.totalorder %s22, 0
      %p126 = por %p124, %p125
      %s127 = ssub.s32 %s25, %s34
      %p128 = scmp.eq.s32.totalorder %s127, 0
      %s130 = sadd.s32 %s129, 1
      %s131 = scalar_select %p128, %s129, %s130
      %p134 = pneg %p128
      %p135 = scmp.eq.s32.totalorder %s16, 1
      %p136 = por %p134, %p135
      %p137 = scmp.ne.s32.totalorder %s129, %s132
      %p138 = scmp.eq.s32.totalorder %s16, 0
      %p139 = por %p137, %p138
      %p140 = scmp.ne.s32.totalorder %s129, %s132
      %p141 = scmp.eq.s32.totalorder %s21, 1
      %p142 = por %p140, %p141
      %p143 = scmp.ne.s32.totalorder %s132, %s133
      %p144 = scmp.eq.s32.totalorder %s21, 0
      %p145 = por %p143, %p144
      %p146 = scmp.ne.s32.totalorder %s132, %s133
      %p147 = scmp.eq.s32.totalorder %s22, 1
      %p148 = por %p146, %p147
      %p150 = scmp.ne.s32.totalorder %s133, %s149
      %p151 = scmp.eq.s32.totalorder %s22, 0
      %p152 = por %p150, %p151
      %s153 = ssub.s32 %s23, %s42
      %s154 = ssub.s32 %s25, %s34
      %s155 = sor.u32 %s153, %s154
      %s156 = ssub.s32 %s24, %s38
      %s157 = sor.u32 %s155, %s156
      %p158 = scmp.eq.s32.totalorder %s157, 0
      %s160 = sadd.s32 %s159, 1
      %s161 = scalar_select %p158, %s159, %s160
      %p164 = pneg %p158
      %p165 = scmp.eq.s32.totalorder %s16, 1
      %p166 = por %p164, %p165
      %p167 = scmp.ne.s32.totalorder %s159, %s162
      %p168 = scmp.eq.s32.totalorder %s16, 0
      %p169 = por %p167, %p168
      %p170 = scmp.ne.s32.totalorder %s159, %s162
      %p171 = scmp.eq.s32.totalorder %s21, 1
      %p172 = por %p170, %p171
      %p173 = scmp.ne.s32.totalorder %s162, %s163
      %p174 = scmp.eq.s32.totalorder %s21, 0
      %p175 = por %p173, %p174
      %p176 = scmp.ne.s32.totalorder %s162, %s163
      %p177 = scmp.eq.s32.totalorder %s22, 1
      %p178 = por %p176, %p177
      %p180 = scmp.ne.s32.totalorder %s163, %s179
      %p181 = scmp.eq.s32.totalorder %s22, 0
      %p182 = por %p180, %p181
      %p183 = scmp.le.s32.totalorder 1, %s16
      %p184 = scmp.lt.s32.totalorder %s16, 3
      %p185 = pnand %p183, %p184
      %p186 = pneg %p185
      // Predicated region
      $region9: #{tpu_custom_call.1} parent=5 // pred_check
        _
      $region10: #{tpu_custom_call.1} parent=5 // pred_check_branch
        %188 = sbr.rel (%p185) target = $region12
      $region11: #{tpu_custom_call.1} parent=5 // pred_region
        %s189 = ssub.s32 %s16, 1
        // Predicated region
        $region13: #{tpu_custom_call.1} parent=11 // pred_check
          %p190 = pneg %p119
        $region14: #{tpu_custom_call.1} parent=11 // pred_check_branch
          %192 = sbr.rel (%p190) target = $region16
        $region15: #{tpu_custom_call.1} parent=11 // pred_region
          %s193 = smul.u32 4, %s28
          %p194 = scmp.lt.s32.totalorder %s193, 3
          %s195 = scalar_select %p194, %s193, 3
          %s196 = smul.addr %s195, 8
          %s197 = scalar_lea.vmem %s2, %s196
          %s198 = smul.u32 4, %s28
        $region16: #{tpu_custom_call.1} parent=11 // pred_fallthru
          _
        // Predicated region
        $region17: #{tpu_custom_call.1} parent=11 // pred_check
          %p199 = pneg %p145
        $region18: #{tpu_custom_call.1} parent=11 // pred_check_branch
          %201 = sbr.rel (%p199) target = $region20
        $region19: #{tpu_custom_call.1} parent=11 // pred_region
          %s202 = smul.u32 4, %s28
          %p203 = scmp.lt.s32.totalorder %s202, 3
          %s204 = scalar_select %p203, %s202, 3
          %s205 = smul.addr %s204, 8
          %s206 = scalar_lea.vmem %s3, %s205
          %s207 = smul.u32 4, %s28
        $region20: #{tpu_custom_call.1} parent=11 // pred_fallthru
          _
      $region12: #{tpu_custom_call.1} parent=5 // pred_fallthru
        _
      %p208 = scmp.lt.s32.totalorder %s16, 2
      // Predicated region
      $region21: #{tpu_custom_call.1} parent=5 // pred_check
        %p209 = pneg %p208
      $region22: #{tpu_custom_call.1} parent=5 // pred_check_branch
        %211 = sbr.rel (%p209) target = $region24
      $region23: #{tpu_custom_call.1} parent=5 // pred_region
        // Predicated region
        $region25: #{tpu_custom_call.1} parent=23 // pred_check
          %p212 = pneg %p57
        $region26: #{tpu_custom_call.1} parent=23 // pred_check_branch
          %214 = sbr.rel (%p212) target = $region28
        $region27: #{tpu_custom_call.1} parent=23 // pred_region
          %s215 = sand.u32 %s47, 1
          %s216 = scalar_lea.sflag [#allocation4], %s215
          %s217 = sand.u32 %s47, 1
          %s218 = smul.addr %s217, 16
          %s219 = scalar_lea.vmem [#allocation3], %s218
          %s221 = ssub.s32 256, 256
          %222 = vsyncadd %s216, %s221
          %s223 = smul.addr %s23, 4
          %s224 = sadd.s32 %s24, %s223
          %s225 = smul.addr %s224, 128
          %s226 = scalar_lea.hbm %s0, %s225
          %s227 = sshll.u32 %s219, 4
          %s228 = int_to_ptr.vmem [resolvable:$true] %s227
          %233 = dma.hbm_to_vmem [thread:$0]  %s226, 256, %s228, %s216, 256, 128, 8
        $region28: #{tpu_custom_call.1} parent=23 // pred_fallthru
          _
        // Predicated region
        $region29: #{tpu_custom_call.1} parent=23 // pred_check
          %p234 = pneg %p87
        $region30: #{tpu_custom_call.1} parent=23 // pred_check_branch
          %236 = sbr.rel (%p234) target = $region32
        $region31: #{tpu_custom_call.1} parent=23 // pred_region
          %s237 = sand.u32 %s77, 1
          %s238 = scalar_lea.sflag [#allocation6], %s237
          %s239 = sand.u32 %s77, 1
          %s240 = smul.addr %s239, 16
          %s241 = scalar_lea.vmem [#allocation5], %s240
          %s242 = sadd.s32 %s24, 1
          %s244 = ssub.s32 256, 256
          %245 = vsyncadd %s238, %s244
          %s246 = smul.addr %s23, 4
          %s247 = sadd.s32 %s242, %s246
          %s248 = smul.addr %s247, 128
          %s249 = scalar_lea.hbm %s1, %s248
          %s250 = sshll.u32 %s241, 4
          %s251 = int_to_ptr.vmem [resolvable:$true] %s250
          %256 = dma.hbm_to_vmem [thread:$0]  %s249, 256, %s251, %s238, 256, 128, 8
        $region32: #{tpu_custom_call.1} parent=23 // pred_fallthru
          _
      $region24: #{tpu_custom_call.1} parent=5 // pred_fallthru
        _
      %p257 = scmp.le.s32.totalorder 1, %s16
      %p258 = scmp.lt.s32.totalorder %s16, 3
      %p259 = pnand %p257, %p258
      %p260 = pneg %p259
      // Predicated region
      $region33: #{tpu_custom_call.1} parent=5 // pred_check
        _
      $region34: #{tpu_custom_call.1} parent=5 // pred_check_branch
        %262 = sbr.rel (%p259) target = $region36
      $region35: #{tpu_custom_call.1} parent=5 // pred_region
        %s263 = ssub.s32 %s16, 1
        %s264 = sand.u32 %s50, 1
        %s265 = scalar_lea.sflag [#allocation4], %s264
        %s266 = sand.u32 %s50, 1
        %s267 = smul.addr %s266, 16
        %s268 = scalar_lea.vmem [#allocation3], %s267
        // Predicated region
        $region37: #{tpu_custom_call.1} parent=35 // pred_check
          %p269 = pneg %p63
        $region38: #{tpu_custom_call.1} parent=35 // pred_check_branch
          %271 = sbr.rel (%p269) target = $region40
        $region39: #{tpu_custom_call.1} parent=35 // pred_region
          %272 = dma.done %s265, 256
        $region40: #{tpu_custom_call.1} parent=35 // pred_fallthru
          _
        %s273 = sand.u32 %s80, 1
        %s274 = scalar_lea.sflag [#allocation6], %s273
        %s275 = sand.u32 %s80, 1
        %s276 = smul.addr %s275, 16
        %s277 = scalar_lea.vmem [#allocation5], %s276
        // Predicated region
        $region41: #{tpu_custom_call.1} parent=35 // pred_check
          %p278 = pneg %p93
        $region42: #{tpu_custom_call.1} parent=35 // pred_check_branch
          %280 = sbr.rel (%p278) target = $region44
        $region43: #{tpu_custom_call.1} parent=35 // pred_region
          %281 = dma.done %s274, 256
        $region44: #{tpu_custom_call.1} parent=35 // pred_fallthru
          _
        %s282 = sand.u32 %s50, 1
        %s283 = scalar_lea.sflag [#allocation4], %s282
        %s284 = sand.u32 %s50, 1
        %s285 = smul.addr %s284, 16
        %s286 = scalar_lea.vmem [#allocation3], %s285
        %p287 = pneg %p63
        %p288 = pneg %p60
        %s289 = sand.u32 %s80, 1
        %s290 = scalar_lea.sflag [#allocation6], %s289
        %s291 = sand.u32 %s80, 1
        %s292 = smul.addr %s291, 16
        %s293 = scalar_lea.vmem [#allocation5], %s292
        %p294 = pneg %p93
        %p295 = pneg %p90
        %s296 = smul.u32 4, %s28
        %p297 = scmp.lt.s32.totalorder %s296, 3
        %s298 = scalar_select %p297, %s296, 3
        %s299 = smul.addr %s298, 8
        %s300 = scalar_lea.vmem %s2, %s299
        %p301 = pneg %p119
        %p302 = pneg %p116
        %s303 = smul.u32 4, %s28
        %p304 = scmp.lt.s32.totalorder %s303, 3
        %s305 = scalar_select %p304, %s303, 3
        %s306 = smul.addr %s305, 8
        %s307 = scalar_lea.vmem %s3, %s306
        %p308 = pneg %p145
        %p309 = pneg %p142
        %p310 = pneg %p175
        %p311 = pneg %p172
        %s312 = smul.u32 4, %s28
        %p313 = scmp.lt.s32.totalorder %s26, 1
        %s314 = scalar_select %p313, %s26, 1
        %p315 = scmp.lt.s32.totalorder %s312, 3
        %s316 = scalar_select %p315, %s312, 3
        %p317 = scmp.lt.s32.totalorder %s27, 0
        %s318 = scalar_select %p317, %s27, 0
        %s319 = sadd.s32 %s318, %s316
        %s320 = smul.addr %s314, 4
        %s321 = sadd.s32 %s319, %s320
        %s322 = smul.addr %s321, 8
        %s323 = scalar_lea.vmem %s4, %s322
        %s324 = sadd.s32 %s27, 1
        %s325 = smul.u32 4, %s28
        %p326 = scmp.lt.s32.totalorder %s325, 3
        %s327 = scalar_select %p326, %s325, 3
        %s328 = smul.addr %s327, 8
        %s329 = scalar_lea.vmem %s2, %s328
        %s330 = smul.u32 4, %s28
        %s331 = smul.u32 4, %s28
        %p332 = scmp.lt.s32.totalorder %s331, 3
        %s333 = scalar_select %p332, %s331, 3
        %s334 = smul.addr %s333, 8
        %s335 = scalar_lea.vmem %s3, %s334
        %s336 = smul.u32 4, %s28
        %s337 = smul.u32 4, %s28
        %p338 = scmp.lt.s32.totalorder %s26, 1
        %s339 = scalar_select %p338, %s26, 1
        %p340 = scmp.lt.s32.totalorder %s337, 3
        %s341 = scalar_select %p340, %s337, 3
        %p342 = scmp.lt.s32.totalorder %s27, 0
        %s343 = scalar_select %p342, %s27, 0
        %s344 = sadd.s32 %s343, %s341
        %s345 = smul.addr %s339, 4
        %s346 = sadd.s32 %s344, %s345
        %s347 = smul.addr %s346, 8
        %s348 = scalar_lea.vmem %s4, %s347
        %s349 = smul.u32 4, %s28
        %p350 = scmp.eq.s32.totalorder %s28, 0
        // Predicated region
        $region45: #{tpu_custom_call.1} parent=35 // pred_check
          %p351 = pneg %p350
        $region46: #{tpu_custom_call.1} parent=35 // pred_check_branch
          %353 = sbr.rel (%p351) target = $region48
        $region47: #{tpu_custom_call.1} parent=35 // pred_region
          %v354 = vld [vmem:[%s268] sm:$0xff]
          %v355 = vld [vmem:[%s268 + $0x8] sm:$0xff]
          %v356 = vld [vmem:[%s277] sm:$0xff]
          %v357 = vld [vmem:[%s277 + $0x8] sm:$0xff]
          %362 = vrot.lane.b32.xlu0 %v354, 127
          %v363 = vpop.permute.xlu0 %362
          %364 = vrot.lane.b32.xlu0 %v356, 127
          %v365 = vpop.permute.xlu0 %364
          %366 = vrot.lane.b32.xlu0 %v355, 127
          %v367 = vpop.permute.xlu0 %366
          %368 = vrot.lane.b32.xlu0 %v357, 127
          %v369 = vpop.permute.xlu0 %368
          %vm370 = vcmask 1039360
          %v371 = vsel %vm370, %v363, %v365
          %v372 = vsel %vm370, %v367, %v369
          %375 = vrot.lane.b32.xlu0 %v354, 126
          %v376 = vpop.permute.xlu0 %375
          %377 = vrot.lane.b32.xlu0 %v356, 126
          %v378 = vpop.permute.xlu0 %377
          %379 = vrot.lane.b32.xlu0 %v355, 126
          %v380 = vpop.permute.xlu0 %379
          %381 = vrot.lane.b32.xlu0 %v357, 126
          %v382 = vpop.permute.xlu0 %381
          %vm383 = vcmask 1031168
          %v384 = vsel %vm383, %v376, %v378
          %v385 = vsel %vm383, %v380, %v382
          %388 = vrot.lane.b32.xlu0 %v354, 125
          %v389 = vpop.permute.xlu0 %388
          %390 = vrot.lane.b32.xlu0 %v356, 125
          %v391 = vpop.permute.xlu0 %390
          %392 = vrot.lane.b32.xlu0 %v355, 125
          %v393 = vpop.permute.xlu0 %392
          %394 = vrot.lane.b32.xlu0 %v357, 125
          %v395 = vpop.permute.xlu0 %394
          %vm396 = vcmask 1022976
          %v397 = vsel %vm396, %v389, %v391
          %v398 = vsel %vm396, %v393, %v395
          %401 = vrot.lane.b32.xlu0 %v354, 124
          %v402 = vpop.permute.xlu0 %401
          %403 = vrot.lane.b32.xlu0 %v356, 124
          %v404 = vpop.permute.xlu0 %403
          %405 = vrot.lane.b32.xlu0 %v355, 124
          %v406 = vpop.permute.xlu0 %405
          %407 = vrot.lane.b32.xlu0 %v357, 124
          %v408 = vpop.permute.xlu0 %407
          %vm409 = vcmask 1014784
          %v410 = vsel %vm409, %v402, %v404
          %v411 = vsel %vm409, %v406, %v408
          %414 = vst [vmem:[#allocation2] sm:$0xff] %v354
          %415 = vst [vmem:[#allocation2 + $0x8] sm:$0xff] %v355
          %416 = vst [vmem:[#allocation2 + $0x10] sm:$0xff] %v371
          %417 = vst [vmem:[#allocation2 + $0x18] sm:$0xff] %v372
          %418 = vst [vmem:[#allocation2 + $0x20] sm:$0xff] %v384
          %419 = vst [vmem:[#allocation2 + $0x28] sm:$0xff] %v385
          %420 = vst [vmem:[#allocation2 + $0x30] sm:$0xff] %v397
          %421 = vst [vmem:[#allocation2 + $0x38] sm:$0xff] %v398
          %422 = vst [vmem:[#allocation2 + $0x40] sm:$0xff] %v410
          %423 = vst [vmem:[#allocation2 + $0x48] sm:$0xff] %v411
        $region48: #{tpu_custom_call.1} parent=35 // pred_fallthru
          _
        %v424 = vld [vmem:[%s329] sm:$0xff]
        %v425 = vld [vmem:[%s329 + $0x8] sm:$0xff]
        %v426 = vld [vmem:[%s329 + $0x10] sm:$0xff]
        %v427 = vld [vmem:[%s329 + $0x18] sm:$0xff]
        %v428 = vld [vmem:[#allocation2] sm:$0xff]
        %v429 = vld [vmem:[#allocation2 + $0x8] sm:$0xff]
        %v430 = vld [vmem:[#allocation2 + $0x10] sm:$0xff]
        %v431 = vld [vmem:[#allocation2 + $0x18] sm:$0xff]
        %v432 = vld [vmem:[#allocation2 + $0x20] sm:$0xff]
        %v433 = vld [vmem:[#allocation2 + $0x28] sm:$0xff]
        %v434 = vld [vmem:[#allocation2 + $0x30] sm:$0xff]
        %v435 = vld [vmem:[#allocation2 + $0x38] sm:$0xff]
        %v436 = vld [vmem:[#allocation2 + $0x40] sm:$0xff]
        %v437 = vld [vmem:[#allocation2 + $0x48] sm:$0xff]
        %v438 = vld [vmem:[%s335] sm:$0xff]
        %v439 = vld [vmem:[%s335 + $0x8] sm:$0xff]
        %v440 = vld [vmem:[%s335 + $0x10] sm:$0xff]
        %v441 = vld [vmem:[%s335 + $0x18] sm:$0xff]
        %443 = vset.pattern.permute.xlu0 0
        %444 = vperm.xlu0 %443, %v438
        %v445 = vpop.permute.xlu0 %444
        %448 = vset.pattern.permute.xlu0 0
        %449 = vperm.xlu0 %448, %v439
        %v450 = vpop.permute.xlu0 %449
        %453 = vset.pattern.permute.xlu0 0
        %454 = vperm.xlu0 %453, %v440
        %v455 = vpop.permute.xlu0 %454
        %458 = vset.pattern.permute.xlu0 0
        %459 = vperm.xlu0 %458, %v441
        %v460 = vpop.permute.xlu0 %459
        %vm462 = vcmask 654336
        %v464 = vsel %vm462, %v424, 0
        %v467 = vsel %vm462, %v425, 0
        %v470 = vsel %vm462, %v426, 0
        %v473 = vsel %vm462, %v427, 0
        %475 = vmatprep.subr.mxu0 0.0
        %476 = vmatpush1.msra.mxu0 %v428
        %477 = vmatprep.subr.mxu0 0.0
        %478 = vmatpush1.msra.mxu0 %v429
        %479 = vmatprep.subr.mxu0 0.0
        %480 = vmatpush1.msra.mxu0 %v430
        %481 = vmatprep.subr.mxu0 0.0
        %482 = vmatpush1.msra.mxu0 %v431
        %483 = vmatprep.subr.mxu0 0.0
        %484 = vmatpush1.msra.mxu0 %v432
        %485 = vmatprep.subr.mxu0 0.0
        %486 = vmatpush1.msra.mxu0 %v433
        %487 = vmatprep.subr.mxu0 0.0
        %488 = vmatpush1.msra.mxu0 %v434
        %489 = vmatprep.subr.mxu0 0.0
        %490 = vmatpush1.msra.mxu0 %v435
        %491 = vmatprep.subr.mxu0 0.0
        %492 = vmatpush1.msra.mxu0 %v436
        %493 = vmatprep.subr.mxu0 0.0
        %494 = vmatpush1.msra.mxu0 %v437
        %495 = vmatprep.subr.mxu0 0.0
        %496 = vmatpush1.msra.mxu0 0.0
        %497 = vmatprep.subr.mxu0 0.0
        %498 = vmatpush1.msra.mxu0 0.0
        %499 = vmatprep.subr.mxu0 0.0
        %500 = vmatpush1.msra.mxu0 0.0
        %501 = vmatprep.subr.mxu0 0.0
        %502 = vmatpush1.msra.mxu0 0.0
        %503 = vmatprep.subr.mxu0 0.0
        %504 = vmatpush1.msra.mxu0 0.0
        %505 = vmatprep.subr.mxu0 0.0
        %506 = vmatpush1.msra.mxu0 0.0
        %507 = vmatprep.subr.mxu0 0.0
        %508 = vmatpush1.msra.mxu0 0.0
        %509 = vmatprep.subr.mxu0 0.0
        %510 = vmatpush1.msra.mxu0 0.0
        %511 = vmatprep.subr.mxu0 0.0
        %512 = vmatpush1.msra.mxu0 0.0
        %513 = vmatprep.subr.mxu0 0.0
        %514 = vmatpush1.msra.mxu0 0.0
        %515 = vmatprep.subr.mxu0 0.0
        %516 = vmatpush1.msra.mxu0 0.0
        %517 = vmatprep.subr.mxu0 0.0
        %518 = vmatpush1.msra.mxu0 0.0
        %519 = vmatprep.subr.mxu0 0.0
        %520 = vmatpush1.msra.mxu0 0.0
        %521 = vmatprep.subr.mxu0 0.0
        %522 = vmatpush1.msra.mxu0 0.0
        %523 = vmatprep.subr.mxu0 0.0
        %524 = vmatpush1.msra.mxu0 0.0
        %525 = vmatprep.subr.mxu0 0.0
        %526 = vmatpush1.msra.mxu0 0.0
        %527 = vmatprep.subr.mxu0 0.0
        %528 = vmatpush1.msra.mxu0 0.0
        %529 = vmatprep.subr.mxu0 0.0
        %530 = vmatpush1.msra.mxu0 0.0
        %531 = vmatprep.subr.mxu0 0.0
        %532 = vmatpush1.msra.mxu0 0.0
        %533 = vmatprep.subr.mxu0 0.0
        %534 = vmatpush1.msra.mxu0 0.0
        %535 = vmatprep.subr.mxu0 0.0
        %536 = vmatpush1.msra.mxu0 0.0
        %537 = vmatprep.subr.mxu0 0.0
        %538 = vmatpush1.msra.mxu0 0.0
        %539 = vmatprep.mubr.f32.mxu0 0.0
        %540 = vmatmul.mubr.f32.gmra.mrb[0].mxu0 %v464
        %v541 = vpop.f32.mrb[0].mxu0
        %v542 = vadd.f32 %v445, %v541
        %v543 = vpop.f32.mrb[0].mxu0
        %544 = vmatprep.mubr.f32.mxu0 0.0
        %545 = vmatmul.mubr.f32.gmra.mrb[0].mxu0 %v467
        %v546 = vpop.f32.mrb[0].mxu0
        %v547 = vadd.f32 %v450, %v546
        %v548 = vpop.f32.mrb[0].mxu0
        %549 = vmatprep.mubr.f32.mxu0 0.0
        %550 = vmatmul.mubr.f32.gmra.mrb[0].mxu0 %v470
        %v551 = vpop.f32.mrb[0].mxu0
        %v552 = vadd.f32 %v455, %v551
        %v553 = vpop.f32.mrb[0].mxu0
        %554 = vmatprep.mubr.f32.mxu0 0.0
        %555 = vmatmul.mubr.f32.gmra.mrb[0].mxu0 %v473
        %v556 = vpop.f32.mrb[0].mxu0
        %v557 = vadd.f32 %v460, %v556
        %v558 = vpop.f32.mrb[0].mxu0
        %559 = vdwg.mxu0
        %v560 = vmax.f32 %v542, 0.0
        %v561 = vmax.f32 %v547, 0.0
        %v562 = vmax.f32 %v552, 0.0
        %v563 = vmax.f32 %v557, 0.0
        %564 = vst [vmem:[%s348] sm:$0xff] %v560
        %565 = vst [vmem:[%s348 + $0x8] sm:$0xff] %v561
        %566 = vst [vmem:[%s348 + $0x10] sm:$0xff] %v562
        %567 = vst [vmem:[%s348 + $0x18] sm:$0xff] %v563
        %s568 = smul.u32 4, %s28
        %p569 = scmp.lt.s32.totalorder %s26, 1
        %s570 = scalar_select %p569, %s26, 1
        %p571 = scmp.lt.s32.totalorder %s568, 3
        %s572 = scalar_select %p571, %s568, 3
        %p573 = scmp.lt.s32.totalorder %s27, 0
        %s574 = scalar_select %p573, %s27, 0
        %s575 = sadd.s32 %s574, %s572
        %s576 = smul.addr %s570, 4
        %s577 = sadd.s32 %s575, %s576
        %s578 = smul.addr %s577, 8
        %s579 = scalar_lea.vmem %s4, %s578
        // Predicated region
        $region49: #{tpu_custom_call.1} parent=35 // pred_check
          %p580 = pneg %p172
        $region50: #{tpu_custom_call.1} parent=35 // pred_check_branch
          %582 = sbr.rel (%p580) target = $region52
        $region51: #{tpu_custom_call.1} parent=35 // pred_region
          %s583 = smul.u32 4, %s28
        $region52: #{tpu_custom_call.1} parent=35 // pred_fallthru
          _
      $region36: #{tpu_custom_call.1} parent=5 // pred_fallthru
        _
      %p584 = scmp.le.s32.totalorder 2, %s16
      // Predicated region
      $region53: #{tpu_custom_call.1} parent=5 // pred_check
        %p585 = pneg %p584
      $region54: #{tpu_custom_call.1} parent=5 // pred_check_branch
        %587 = sbr.rel (%p585) target = $region56
      $region55: #{tpu_custom_call.1} parent=5 // pred_region
        %s588 = ssub.s32 %s16, 2
        // Predicated region
        $region57: #{tpu_custom_call.1} parent=55 // pred_check
          %p589 = pneg %p178
        $region58: #{tpu_custom_call.1} parent=55 // pred_check_branch
          %591 = sbr.rel (%p589) target = $region60
        $region59: #{tpu_custom_call.1} parent=55 // pred_region
          %s592 = smul.u32 4, %s31
          %p593 = scmp.lt.s32.totalorder %s29, 1
          %s594 = scalar_select %p593, %s29, 1
          %p595 = scmp.lt.s32.totalorder %s592, 3
          %s596 = scalar_select %p595, %s592, 3
          %p597 = scmp.lt.s32.totalorder %s30, 0
          %s598 = scalar_select %p597, %s30, 0
          %s599 = sadd.s32 %s598, %s596
          %s600 = smul.addr %s594, 4
          %s601 = sadd.s32 %s599, %s600
          %s602 = smul.addr %s601, 8
          %s603 = scalar_lea.vmem %s4, %s602
        $region60: #{tpu_custom_call.1} parent=55 // pred_fallthru
          _
      $region56: #{tpu_custom_call.1} parent=5 // pred_fallthru
        _
    $region6: #{tpu_custom_call.1} parent=1 // loop_footer
      %s20 = sadd.s32 1, %s16
    $region7: #{tpu_custom_call.1} parent=1 // loop_footer_branch
      %15 = sbr.rel target = $region3
    $region8: #{tpu_custom_call.1} parent=1 // loop_exit
      _
    %604 = vsyncpa [#allocation4], 1
    %s605 = scalar_lea.sflag [#allocation4], 1
    %606 = vsyncpa %s605, 1
    %607 = vsyncpa [#allocation6], 1
    %s608 = scalar_lea.sflag [#allocation6], 1
    %609 = vsyncpa %s608, 1

</llo_original>
